<compile_context>
chip_gen: v6e
topology: v6e:2x2x1
jax: 0.10.0
libtpu: 0.0.40
codegen_flags: <defaults>
</compile_context>

<pallas_src>
import jax
import jax.numpy as jnp
from jax.experimental import pallas as pl
from jax.experimental.pallas import tpu as pltpu

EPS = 1e-5  # nn.BatchNorm1d default eps


def fused_encoder_kernel(n_nodes_ref, a_conv_ref, a_act_ref,   # SMEM scalars
                         a_ref, heat_ref, w_ref, b_ref,        # VMEM inputs
                         gamma_ref, beta_ref,
                         h_ref, pool_ref):                     # resident VMEM outputs
    i = pl.program_id(0)

    # Layer 0: seed the resident h carry with the input features, zero the pool acc.
    @pl.when(i == 0)
    def _init():
        h_ref[...] = heat_ref[...]
        pool_ref[...] = jnp.zeros_like(pool_ref)

    # ---- GraphConv (norm='none', edge_weight): rst = (A @ h) @ W + b ------------
    # A is bf16; cast h to bf16 for the N^2 matmul, accumulate in f32.
    # (Din == Dout after padding, so the DGL matmul-order optimization is moot here.)
    h_bf16 = h_ref[...].astype(jnp.bfloat16)
    agg = jnp.dot(a_ref[...], h_bf16, preferred_element_type=jnp.float32)
    rst = jnp.dot(agg, w_ref[0], preferred_element_type=jnp.float32) + b_ref[0]

    # GraphConv's own activation: PReLU with a single learnable slope (SMEM scalar).
    a1 = a_conv_ref[i]
    rst = jnp.where(rst > 0, rst, a1 * rst)

    # ---- BatchNorm1d over real nodes (training-mode, biased variance) -----------
    n_real = n_nodes_ref[0]
    row_ids = jax.lax.broadcasted_iota(jnp.int32, rst.shape, 0)
    node_mask = row_ids < n_real
    rst_m = jnp.where(node_mask, rst, 0.0)

    inv_n = 1.0 / n_real.astype(jnp.float32)
    mean = jnp.sum(rst_m, axis=0, keepdims=True) * inv_n                 # E[x]
    mean_sq = jnp.sum(rst_m * rst_m, axis=0, keepdims=True) * inv_n      # E[x^2]
    var = jnp.maximum(mean_sq - mean * mean, 0.0)
    y = (rst - mean) * jax.lax.rsqrt(var + EPS)
    y = y * gamma_ref[0] + beta_ref[0]

    # Outer PReLU (self.actions[i]).
    a2 = a_act_ref[i]
    y = jnp.where(y > 0, y, a2 * y)

    # Zero padded rows so they never leak into later layers or the pooling sum.
    y = jnp.where(node_mask, y, 0.0)

    # Carry h across layers; accumulate the SumPooling of every layer into gh.
    h_ref[...] = y
    pool_ref[...] += jnp.sum(y, axis=0, keepdims=True)


def _round_up(x, m):
    return (x + m - 1) // m * m


def encoder2_forward(A, heat, params):
    """A: (N, N) dense weighted adjacency, A[dst, src] = diff_weight of edge src->dst.
       heat: (N, in_hidden).  params: per-layer dicts (W, b, a_conv, gamma, beta, a_act)."""
    N = A.shape[0]
    in_hidden = heat.shape[1]
    out_hidden = params[0]["W"].shape[1]
    n_layers = len(params)

    # Pad nodes & features to 128 multiples: lane-dense stores, 128-wide MXU dims.
    n_pad = _round_up(N, 128)
    d_pad = _round_up(max(in_hidden, out_hidden), 128)

    a_p = jnp.zeros((n_pad, n_pad), jnp.bfloat16).at[:N, :N].set(A.astype(jnp.bfloat16))
    heat_p = jnp.zeros((n_pad, d_pad), jnp.float32).at[:N, :in_hidden].set(heat)

    w_l, b_l, g_l, be_l, ac_l, aa_l = [], [], [], [], [], []
    din = in_hidden
    for p in params:
        w_l.append(jnp.zeros((d_pad, d_pad), jnp.float32).at[:din, :out_hidden].set(p["W"]))
        b_l.append(jnp.zeros((1, d_pad), jnp.float32).at[0, :out_hidden].set(p["b"]))
        g_l.append(jnp.ones((1, d_pad), jnp.float32).at[0, :out_hidden].set(p["gamma"]))
        be_l.append(jnp.zeros((1, d_pad), jnp.float32).at[0, :out_hidden].set(p["beta"]))
        ac_l.append(jnp.asarray(p["a_conv"], jnp.float32).reshape(()))
        aa_l.append(jnp.asarray(p["a_act"], jnp.float32).reshape(()))
        din = out_hidden

    w_s = jnp.stack(w_l)       # (n, d_pad, d_pad)
    b_s = jnp.stack(b_l)       # (n, 1, d_pad)
    g_s = jnp.stack(g_l)       # (n, 1, d_pad)
    be_s = jnp.stack(be_l)     # (n, 1, d_pad)
    a_conv = jnp.stack(ac_l)   # (n,)
    a_act = jnp.stack(aa_l)    # (n,)
    n_nodes = jnp.array([N], jnp.int32)

    smem = pl.BlockSpec(memory_space=pltpu.MemorySpace.SMEM)
    h_pad, gh_pad = pl.pallas_call(
        fused_encoder_kernel,
        grid=(n_layers,),
        in_specs=[
            smem,                                                  # n_nodes
            smem,                                                  # a_conv slopes
            smem,                                                  # a_act slopes
            pl.BlockSpec((n_pad, n_pad), lambda i: (0, 0)),        # A  (VMEM resident)
            pl.BlockSpec((n_pad, d_pad), lambda i: (0, 0)),        # heat (VMEM resident)
            pl.BlockSpec((1, d_pad, d_pad), lambda i: (i, 0, 0)),  # W[i]  (streamed)
            pl.BlockSpec((1, 1, d_pad), lambda i: (i, 0, 0)),      # b[i]
            pl.BlockSpec((1, 1, d_pad), lambda i: (i, 0, 0)),      # gamma[i]
            pl.BlockSpec((1, 1, d_pad), lambda i: (i, 0, 0)),      # beta[i]
        ],
        out_specs=(
            pl.BlockSpec((n_pad, d_pad), lambda i: (0, 0)),        # h carry / final h
            pl.BlockSpec((1, d_pad), lambda i: (0, 0)),            # gh accumulator
        ),
        out_shape=(
            jax.ShapeDtypeStruct((n_pad, d_pad), jnp.float32),
            jax.ShapeDtypeStruct((1, d_pad), jnp.float32),
        ),
        compiler_params=pltpu.CompilerParams(
            dimension_semantics=("arbitrary",),                    # layers are sequential
        ),
    )(n_nodes, a_conv, a_act, a_p, heat_p, w_s, b_s, g_s, be_s)

    return h_pad[:N, :out_hidden], gh_pad[:, :out_hidden]


def encoder2_reference(A, heat, params):
    """Pure-JAX reference (same bf16 precision for the A matmul as the kernel)."""
    h, gh = heat, None
    a_bf = A.astype(jnp.bfloat16)
    for p in params:
        agg = jnp.dot(a_bf, h.astype(jnp.bfloat16), preferred_element_type=jnp.float32)
        rst = jnp.dot(agg, p["W"], preferred_element_type=jnp.float32) + p["b"]
        rst = jnp.where(rst > 0, rst, p["a_conv"] * rst)
        mean = jnp.mean(rst, axis=0, keepdims=True)
        var = jnp.maximum(jnp.mean(rst * rst, axis=0, keepdims=True) - mean * mean, 0.0)
        y = (rst - mean) * jax.lax.rsqrt(var + EPS)
        y = y * p["gamma"] + p["beta"]
        y = jnp.where(y > 0, y, p["a_act"] * y)
        h = y
        pooled = jnp.sum(y, axis=0, keepdims=True)
        gh = pooled if gh is None else gh + pooled
    return h, gh


def init_params(key, in_hidden, out_hidden, n):
    params = []
    din = in_hidden
    for _ in range(n):
        key, kw = jax.random.split(key)
        limit = (6.0 / (din + out_hidden)) ** 0.5          # Xavier-uniform (DGL GraphConv)
        params.append(dict(
            W=jax.random.uniform(kw, (din, out_hidden), jnp.float32, -limit, limit),
            b=jnp.zeros((out_hidden,), jnp.float32),       # GraphConv bias init
            a_conv=jnp.float32(0.25),                      # nn.PReLU default slope
            gamma=jnp.ones((out_hidden,), jnp.float32),    # BatchNorm weight
            beta=jnp.zeros((out_hidden,), jnp.float32),    # BatchNorm bias
            a_act=jnp.float32(0.25),                       # outer PReLU
        ))
        din = out_hidden
    return params


if __name__ == "__main__":
    # Small deterministic problem: 8 nodes, in_hidden=16, out_hidden=32, 2 layers
    # (padded internally to 128x128 tiles by the wrapper).
    N, in_hidden, out_hidden, n_layers = 8, 16, 32, 2
    key = jax.random.PRNGKey(0)
    k_adj, k_mask, k_feat, k_par = jax.random.split(key, 4)

    weights = jax.random.uniform(k_adj, (N, N), jnp.float32)
    mask = (jax.random.uniform(k_mask, (N, N)) > 0.5).astype(jnp.float32)
    A = weights * mask                                   # A[dst, src] = diff_weight
    heat = jax.random.normal(k_feat, (N, in_hidden), jnp.float32)
    params = init_params(k_par, in_hidden, out_hidden, n_layers)

    fwd = jax.jit(encoder2_forward)
    h, gh = fwd(A, heat, params)
    jax.block_until_ready((h, gh))
    assert h.shape == (N, out_hidden) and gh.shape == (1, out_hidden)

    h_ref, gh_ref = encoder2_reference(A, heat, params)
    assert jnp.allclose(h, h_ref, atol=2e-2, rtol=2e-2), float(jnp.max(jnp.abs(h - h_ref)))
    assert jnp.allclose(gh, gh_ref, atol=5e-2, rtol=2e-2), float(jnp.max(jnp.abs(gh - gh_ref)))
    print("KERNEL_OK")
</pallas_src>

<mosaic_0001>
module attributes {stable_mosaic.version = 11 : i64} {
  func.func @fused_encoder_kernel(%arg0: i32, %arg1: memref<1xi32, #tpu.memory_space<smem>>, %arg2: memref<2xf32, #tpu.memory_space<smem>>, %arg3: memref<2xf32, #tpu.memory_space<smem>>, %arg4: memref<128x128xbf16, #tpu.memory_space<vmem>>, %arg5: memref<128x128xf32, #tpu.memory_space<vmem>>, %arg6: memref<1x128x128xf32, #tpu.memory_space<vmem>>, %arg7: memref<1x1x128xf32, #tpu.memory_space<vmem>>, %arg8: memref<1x1x128xf32, #tpu.memory_space<vmem>>, %arg9: memref<1x1x128xf32, #tpu.memory_space<vmem>>, %arg10: memref<128x128xf32, #tpu.memory_space<vmem>>, %arg11: memref<1x128xf32, #tpu.memory_space<vmem>>) attributes {dimension_semantics = [#tpu.dimension_semantics<arbitrary>], iteration_bounds = array<i64: 2>, scalar_prefetch = 0 : i64, scratch_operands = 0 : i64, tpu.core_type = #tpu.core_type<tc>, window_params = [{transform_indices = @transform_0, window_bounds = array<i64: 1>}, {transform_indices = @transform_1, window_bounds = array<i64: 2>}, {transform_indices = @transform_2, window_bounds = array<i64: 2>}, {pipeline_mode = #tpu.pipeline_mode<synchronous>, transform_indices = @transform_3, window_bounds = array<i64: 128, 128>}, {pipeline_mode = #tpu.pipeline_mode<synchronous>, transform_indices = @transform_4, window_bounds = array<i64: 128, 128>}, {transform_indices = @transform_5, window_bounds = array<i64: 1, 128, 128>}, {transform_indices = @transform_6, window_bounds = array<i64: 1, 1, 128>}, {transform_indices = @transform_7, window_bounds = array<i64: 1, 1, 128>}, {transform_indices = @transform_8, window_bounds = array<i64: 1, 1, 128>}, {pipeline_mode = #tpu.pipeline_mode<synchronous>, transform_indices = @transform_9, window_bounds = array<i64: 128, 128>}, {pipeline_mode = #tpu.pipeline_mode<synchronous>, transform_indices = @transform_10, window_bounds = array<i64: 1, 128>}]} {
    %c0_i32 = arith.constant 0 : i32
    %0 = arith.cmpi eq, %arg0, %c0_i32 : i32
    %1 = arith.extui %0 : i1 to i32
    %c0_i32_0 = arith.constant 0 : i32
    %2 = arith.cmpi ne, %1, %c0_i32_0 : i32
    scf.if %2 {
      %c0_34 = arith.constant 0 : index
      %c0_35 = arith.constant 0 : index
      %72 = vector.load %arg5[%c0_34, %c0_35] : memref<128x128xf32, #tpu.memory_space<vmem>>, vector<128x128xf32>
      %c0_36 = arith.constant 0 : index
      %c0_37 = arith.constant 0 : index
      %73 = vector.load %arg10[%c0_36, %c0_37] : memref<128x128xf32, #tpu.memory_space<vmem>>, vector<128x128xf32>
      tpu.vector_store %arg10[%c0_36, %c0_37], %72 {strides = array<i32>} : memref<128x128xf32, #tpu.memory_space<vmem>>, vector<128x128xf32>,
      %cst_38 = arith.constant 0.000000e+00 : f32
      %74 = vector.broadcast %cst_38 : f32 to vector<1x128xf32>
      %c0_39 = arith.constant 0 : index
      %c0_40 = arith.constant 0 : index
      %75 = vector.load %arg11[%c0_39, %c0_40] : memref<1x128xf32, #tpu.memory_space<vmem>>, vector<1x128xf32>
      tpu.vector_store %arg11[%c0_39, %c0_40], %74 {strides = array<i32>} : memref<1x128xf32, #tpu.memory_space<vmem>>, vector<1x128xf32>,
    } else {
    }
    %c0 = arith.constant 0 : index
    %c0_1 = arith.constant 0 : index
    %3 = vector.load %arg10[%c0, %c0_1] : memref<128x128xf32, #tpu.memory_space<vmem>>, vector<128x128xf32>
    %4 = arith.truncf %3 : vector<128x128xf32> to vector<128x128xbf16>
    %c0_2 = arith.constant 0 : index
    %c0_3 = arith.constant 0 : index
    %5 = vector.load %arg4[%c0_2, %c0_3] : memref<128x128xbf16, #tpu.memory_space<vmem>>, vector<128x128xbf16>
    %cst = arith.constant dense<0.000000e+00> : vector<128x128xf32>
    %6 = tpu.matmul %5, %4, %cst {dimension_numbers = #tpu.dot_dimension_numbers<[1], [0], [0], [1], [0, 0, 1, 1], [], []>} : vector<128x128xbf16>, vector<128x128xbf16>, vector<128x128xf32> -> vector<128x128xf32>
    %c0_4 = arith.constant 0 : index
    %c0_5 = arith.constant 0 : index
    %c0_6 = arith.constant 0 : index
    %7 = vector.load %arg6[%c0_4, %c0_5, %c0_6] : memref<1x128x128xf32, #tpu.memory_space<vmem>>, vector<1x128x128xf32>
    %8 = vector.shape_cast %7 : vector<1x128x128xf32> to vector<128x128xf32>
    %cst_7 = arith.constant dense<0.000000e+00> : vector<128x128xf32>
    %9 = tpu.matmul %6, %8, %cst_7 {dimension_numbers = #tpu.dot_dimension_numbers<[1], [0], [0], [1], [0, 0, 1, 1], [], []>} : vector<128x128xf32>, vector<128x128xf32>, vector<128x128xf32> -> vector<128x128xf32>
    %c0_8 = arith.constant 0 : index
    %c0_9 = arith.constant 0 : index
    %c0_10 = arith.constant 0 : index
    %10 = vector.load %arg7[%c0_8, %c0_9, %c0_10] : memref<1x1x128xf32, #tpu.memory_space<vmem>>, vector<1x1x128xf32>
    %11 = vector.shape_cast %10 : vector<1x1x128xf32> to vector<1x128xf32>
    %12 = vector.broadcast %11 : vector<1x128xf32> to vector<128x128xf32>
    %13 = arith.addf %9, %12 : vector<128x128xf32>
    %14 = arith.index_cast %arg0 : i32 to index
    %15 = memref.load %arg2[%14] : memref<2xf32, #tpu.memory_space<smem>>
    %cst_11 = arith.constant 0.000000e+00 : f32
    %16 = vector.broadcast %cst_11 : f32 to vector<128x128xf32>
    %17 = arith.cmpf ogt, %13, %16 : vector<128x128xf32>
    %18 = vector.broadcast %15 : f32 to vector<128x128xf32>
    %19 = arith.mulf %18, %13 : vector<128x128xf32>
    %20 = arith.select %17, %13, %19 : vector<128x128xi1>, vector<128x128xf32>
    %c0_12 = arith.constant 0 : index
    %21 = memref.load %arg1[%c0_12] : memref<1xi32, #tpu.memory_space<smem>>
    %22 = tpu.iota {dimensions = array<i32: 0>} : vector<128x128xi32>
    %23 = vector.broadcast %21 : i32 to vector<128x128xi32>
    %24 = arith.cmpi slt, %22, %23 : vector<128x128xi32>
    %cst_13 = arith.constant 0.000000e+00 : f32
    %25 = vector.broadcast %cst_13 : f32 to vector<128x128xf32>
    %26 = arith.select %24, %20, %25 : vector<128x128xi1>, vector<128x128xf32>
    %27 = arith.sitofp %21 : i32 to f32
    %cst_14 = arith.constant 1.000000e+00 : f32
    %28 = arith.divf %cst_14, %27 : f32
    %cst_15 = arith.constant dense<0.000000e+00> : vector<128xf32>
    %29 = vector.multi_reduction <add>, %26, %cst_15 [0] : vector<128x128xf32> to vector<128xf32>
    %30 = vector.shape_cast %29 : vector<128xf32> to vector<1x128xf32>
    %31 = vector.broadcast %28 : f32 to vector<1x128xf32>
    %32 = arith.mulf %30, %31 : vector<1x128xf32>
    %33 = arith.mulf %26, %26 : vector<128x128xf32>
    %cst_16 = arith.constant dense<0.000000e+00> : vector<128xf32>
    %34 = vector.multi_reduction <add>, %33, %cst_16 [0] : vector<128x128xf32> to vector<128xf32>
    %35 = vector.shape_cast %34 : vector<128xf32> to vector<1x128xf32>
    %36 = vector.broadcast %28 : f32 to vector<1x128xf32>
    %37 = arith.mulf %35, %36 : vector<1x128xf32>
    %38 = arith.mulf %32, %32 : vector<1x128xf32>
    %39 = arith.subf %37, %38 : vector<1x128xf32>
    %cst_17 = arith.constant 0.000000e+00 : f32
    %40 = vector.broadcast %cst_17 : f32 to vector<1x128xf32>
    %41 = arith.maximumf %39, %40 : vector<1x128xf32>
    %42 = vector.broadcast %32 : vector<1x128xf32> to vector<128x128xf32>
    %43 = arith.subf %20, %42 : vector<128x128xf32>
    %cst_18 = arith.constant 9.99999974E-6 : f32
    %44 = vector.broadcast %cst_18 : f32 to vector<1x128xf32>
    %45 = arith.addf %41, %44 : vector<1x128xf32>
    %46 = math.rsqrt %45 : vector<1x128xf32>
    %47 = vector.broadcast %46 : vector<1x128xf32> to vector<128x128xf32>
    %48 = arith.mulf %43, %47 : vector<128x128xf32>
    %c0_19 = arith.constant 0 : index
    %c0_20 = arith.constant 0 : index
    %c0_21 = arith.constant 0 : index
    %49 = vector.load %arg8[%c0_19, %c0_20, %c0_21] : memref<1x1x128xf32, #tpu.memory_space<vmem>>, vector<1x1x128xf32>
    %50 = vector.shape_cast %49 : vector<1x1x128xf32> to vector<1x128xf32>
    %51 = vector.broadcast %50 : vector<1x128xf32> to vector<128x128xf32>
    %52 = arith.mulf %48, %51 : vector<128x128xf32>
    %c0_22 = arith.constant 0 : index
    %c0_23 = arith.constant 0 : index
    %c0_24 = arith.constant 0 : index
    %53 = vector.load %arg9[%c0_22, %c0_23, %c0_24] : memref<1x1x128xf32, #tpu.memory_space<vmem>>, vector<1x1x128xf32>
    %54 = vector.shape_cast %53 : vector<1x1x128xf32> to vector<1x128xf32>
    %55 = vector.broadcast %54 : vector<1x128xf32> to vector<128x128xf32>
    %56 = arith.addf %52, %55 : vector<128x128xf32>
    %57 = arith.index_cast %arg0 : i32 to index
    %58 = memref.load %arg3[%57] : memref<2xf32, #tpu.memory_space<smem>>
    %cst_25 = arith.constant 0.000000e+00 : f32
    %59 = vector.broadcast %cst_25 : f32 to vector<128x128xf32>
    %60 = arith.cmpf ogt, %56, %59 : vector<128x128xf32>
    %61 = vector.broadcast %58 : f32 to vector<128x128xf32>
    %62 = arith.mulf %61, %56 : vector<128x128xf32>
    %63 = arith.select %60, %56, %62 : vector<128x128xi1>, vector<128x128xf32>
    %cst_26 = arith.constant 0.000000e+00 : f32
    %64 = vector.broadcast %cst_26 : f32 to vector<128x128xf32>
    %65 = arith.select %24, %63, %64 : vector<128x128xi1>, vector<128x128xf32>
    %c0_27 = arith.constant 0 : index
    %c0_28 = arith.constant 0 : index
    %66 = vector.load %arg10[%c0_27, %c0_28] : memref<128x128xf32, #tpu.memory_space<vmem>>, vector<128x128xf32>
    tpu.vector_store %arg10[%c0_27, %c0_28], %65 {strides = array<i32>} : memref<128x128xf32, #tpu.memory_space<vmem>>, vector<128x128xf32>,
    %c0_29 = arith.constant 0 : index
    %c0_30 = arith.constant 0 : index
    %67 = vector.load %arg11[%c0_29, %c0_30] : memref<1x128xf32, #tpu.memory_space<vmem>>, vector<1x128xf32>
    %cst_31 = arith.constant dense<0.000000e+00> : vector<128xf32>
    %68 = vector.multi_reduction <add>, %65, %cst_31 [0] : vector<128x128xf32> to vector<128xf32>
    %69 = vector.shape_cast %68 : vector<128xf32> to vector<1x128xf32>
    %70 = arith.addf %67, %69 : vector<1x128xf32>
    %c0_32 = arith.constant 0 : index
    %c0_33 = arith.constant 0 : index
    %71 = vector.load %arg11[%c0_32, %c0_33] : memref<1x128xf32, #tpu.memory_space<vmem>>, vector<1x128xf32>
    tpu.vector_store %arg11[%c0_32, %c0_33], %70 {strides = array<i32>} : memref<1x128xf32, #tpu.memory_space<vmem>>, vector<1x128xf32>,
    return
  }
  func.func @transform_0(%arg0: i32) -> i32 {
    %c0_i32 = arith.constant 0 : i32
    %c0_i32_0 = arith.constant 0 : i32
    return %c0_i32 : i32
  }
  func.func @transform_1(%arg0: i32) -> i32 {
    %c0_i32 = arith.constant 0 : i32
    %c0_i32_0 = arith.constant 0 : i32
    return %c0_i32 : i32
  }
  func.func @transform_2(%arg0: i32) -> i32 {
    %c0_i32 = arith.constant 0 : i32
    %c0_i32_0 = arith.constant 0 : i32
    return %c0_i32 : i32
  }
  func.func @transform_3(%arg0: i32) -> (i32, i32) {
    %c0_i32 = arith.constant 0 : i32
    %c0_i32_0 = arith.constant 0 : i32
    %c0_i32_1 = arith.constant 0 : i32
    return %c0_i32, %c0_i32_0 : i32, i32
  }
  func.func @transform_4(%arg0: i32) -> (i32, i32) {
    %c0_i32 = arith.constant 0 : i32
    %c0_i32_0 = arith.constant 0 : i32
    %c0_i32_1 = arith.constant 0 : i32
    return %c0_i32, %c0_i32_0 : i32, i32
  }
  func.func @transform_5(%arg0: i32) -> (i32, i32, i32) {
    %c0_i32 = arith.constant 0 : i32
    %c0_i32_0 = arith.constant 0 : i32
    %c0_i32_1 = arith.constant 0 : i32
    return %arg0, %c0_i32, %c0_i32_0 : i32, i32, i32
  }
  func.func @transform_6(%arg0: i32) -> (i32, i32, i32) {
    %c0_i32 = arith.constant 0 : i32
    %c0_i32_0 = arith.constant 0 : i32
    %c0_i32_1 = arith.constant 0 : i32
    return %arg0, %c0_i32, %c0_i32_0 : i32, i32, i32
  }
  func.func @transform_7(%arg0: i32) -> (i32, i32, i32) {
    %c0_i32 = arith.constant 0 : i32
    %c0_i32_0 = arith.constant 0 : i32
    %c0_i32_1 = arith.constant 0 : i32
    return %arg0, %c0_i32, %c0_i32_0 : i32, i32, i32
  }
  func.func @transform_8(%arg0: i32) -> (i32, i32, i32) {
    %c0_i32 = arith.constant 0 : i32
    %c0_i32_0 = arith.constant 0 : i32
    %c0_i32_1 = arith.constant 0 : i32
    return %arg0, %c0_i32, %c0_i32_0 : i32, i32, i32
  }
  func.func @transform_9(%arg0: i32) -> (i32, i32) {
    %c0_i32 = arith.constant 0 : i32
    %c0_i32_0 = arith.constant 0 : i32
    %c0_i32_1 = arith.constant 0 : i32
    return %c0_i32, %c0_i32_0 : i32, i32
  }
  func.func @transform_10(%arg0: i32) -> (i32, i32) {
    %c0_i32 = arith.constant 0 : i32
    %c0_i32_0 = arith.constant 0 : i32
    %c0_i32_1 = arith.constant 0 : i32
    return %c0_i32, %c0_i32_0 : i32, i32
  }
}

</mosaic_0001>

<llo_original>
// kernel: encoder2_forward.1
$region0: #{encoder2_forward.1}
  #allocation0 [shape = 'u32[]', space=smem, size = 0x4, offset = 0x4, fixed_abs, tag = 'smem constant byte address 0x4 - core index']
  #allocation1 [shape = 'u32[144,128]{1,0:T(1,128)}', space=vmem, size = 0x12000, scoped, tag = 'internal scratch']
  #allocation2 [shape = 's32[1]{0:T(128)S(6)}', space=smem, size = 0x200, scoped, tag = 'scoped memory for encoder2_forward.1']
  %s0 = inlined_call_operand.<no memory space> [shape: s32[1], index: 0, kind: input, shape index: {}]
  %s1 = inlined_call_operand.vmem [shape: f32[2], index: 1, kind: input, shape index: {}]
  %s2 = inlined_call_operand.vmem [shape: f32[2], index: 2, kind: input, shape index: {}]
  %s3 = inlined_call_operand.vmem [shape: bf16[128,128], index: 3, kind: input, shape index: {}]
  %s4 = inlined_call_operand.vmem [shape: f32[128,128], index: 4, kind: input, shape index: {}]
  %s5 = inlined_call_operand.vmem [shape: f32[2,128,128], index: 5, kind: input, shape index: {}]
  %s6 = inlined_call_operand.vmem [shape: f32[2,1,128], index: 6, kind: input, shape index: {}]
  %s7 = inlined_call_operand.vmem [shape: f32[2,1,128], index: 7, kind: input, shape index: {}]
  %s8 = inlined_call_operand.vmem [shape: f32[2,1,128], index: 8, kind: input, shape index: {}]
  %s9 = inlined_call_operand.vmem [shape: f32[128,128], index: 9, kind: output, shape index: {0}]
  %s10 = inlined_call_operand.hbm [shape: f32[1,128], index: 10, kind: output, shape index: {1}]
  %11 = xla_tuple %s9, %s10
  %s12 = sld [smem:[#allocation0]]
  $region89: #{encoder2_forward.1} parent=0
    _
  %s14 = ssub.s32 1, %s12
  %s15 = scalar_select 0, %s14, %s12
  %16 = sst [smem:[#allocation2]] %s0
  $region1: #{encoder2_forward.1} parent=0
    #allocation3 [shape = 'u8[512]{0}', space=smem, size = 0x200, scoped, tag = 'input window, operand 1, single buffered']
    #allocation4 [shape = 's32[2]{0}', space=sflag, size = 0x8, scoped, tag = 'scoped memory for encoder2_forward.1']
    #allocation5 [shape = 's32[2]{0}', space=sflag, size = 0x8, scoped, tag = 'scoped memory for encoder2_forward.1']
    #allocation6 [shape = 'u8[512]{0}', space=smem, size = 0x200, scoped, tag = 'input window, operand 2, single buffered']
    #allocation7 [shape = 's32[1]{0}', space=sflag, size = 0x4, scoped, tag = 'scoped memory for encoder2_forward.1']
    #allocation8 [shape = 'u8[512]{0}', space=vmem, size = 0x400, scoped, tag = 'output window, operand 1, single buffered']
    %17 = vsyncpa [#allocation5], 0
    %18 = vsyncpa [#allocation7], 0
    %19 = vsyncpa [#allocation4], 0
    loop: start=0, step=1, limit=4
    $region2: #{encoder2_forward.1} parent=1 // loop_pre_header
      _
    $region3: #{encoder2_forward.1} parent=1 // loop_header
      %s21 = sphi 0, %s25
      %p22 = scmp.ge.s32.totalorder %s21, 4
      %s29 = sphi 0, %s29
      %s31 = sphi 0, %s29
      %s32 = sphi 0, %s31
      %s46 = sphi 0, %s32
      %s50 = sphi 0, %s50
      %s52 = sphi 0, %s50
      %s53 = sphi 0, %s52
      %s67 = sphi 0, %s53
      %s71 = sphi 0, %s71
      %s73 = sphi 0, %s71
      %s74 = sphi 0, %s73
      %s88 = sphi 0, %s74
      %s92 = sphi 0, %s92
      %s94 = sphi 0, %s92
      %s95 = sphi 0, %s94
      %s109 = sphi 0, %s95
      %s113 = sphi 0, %s113
      %s115 = sphi 0, %s113
      %s116 = sphi 0, %s115
      %s130 = sphi 0, %s116
      %s136 = sphi 0, %s138
      %s139 = sphi 0, %s136
      %s140 = sphi 0, %s139
      %s156 = sphi 0, %s140
      %s162 = sphi 0, %s164
      %s165 = sphi 0, %s162
      %s166 = sphi 0, %s165
      %s182 = sphi 0, %s166
      %s188 = sphi 0, %s190
      %s191 = sphi 0, %s188
      %s192 = sphi 0, %s191
      %s208 = sphi 0, %s192
      %s214 = sphi 0, %s216
      %s217 = sphi 0, %s214
      %s218 = sphi 0, %s217
      %s234 = sphi 0, %s218
      %s238 = sphi 0, %s238
      %s240 = sphi 0, %s238
      %s241 = sphi 0, %s240
      %s255 = sphi 0, %s241
      %s259 = sphi 0, %s259
      %s261 = sphi 0, %s259
      %s262 = sphi 0, %s261
      %s276 = sphi 0, %s262
    $region4: #{encoder2_forward.1} parent=1 // loop_header_branch
      %24 = sbr.rel (%p22) target = $region8
    $region5: #{encoder2_forward.1} parent=1 // loop_body
      %s26 = ssub.s32 %s21, 1
      %s27 = ssub.s32 %s21, 2
      %s28 = sadd.s32 %s21, 1
      %s30 = sadd.s32 %s29, 1
      %p33 = scmp.eq.s32.totalorder %s21, 1
      %p34 = scmp.ne.s32.totalorder %s29, %s31
      %p35 = scmp.eq.s32.totalorder %s21, 0
      %p36 = por %p34, %p35
      %p37 = scmp.ne.s32.totalorder %s29, %s31
      %p38 = scmp.eq.s32.totalorder %s26, 1
      %p39 = por %p37, %p38
      %p40 = scmp.ne.s32.totalorder %s31, %s32
      %p41 = scmp.eq.s32.totalorder %s26, 0
      %p42 = por %p40, %p41
      %p43 = scmp.ne.s32.totalorder %s31, %s32
      %p44 = scmp.eq.s32.totalorder %s27, 1
      %p45 = por %p43, %p44
      %p47 = scmp.ne.s32.totalorder %s32, %s46
      %p48 = scmp.eq.s32.totalorder %s27, 0
      %p49 = por %p47, %p48
      %s51 = sadd.s32 %s50, 1
      %p54 = scmp.eq.s32.totalorder %s21, 1
      %p55 = scmp.ne.s32.totalorder %s50, %s52
      %p56 = scmp.eq.s32.totalorder %s21, 0
      %p57 = por %p55, %p56
      %p58 = scmp.ne.s32.totalorder %s50, %s52
      %p59 = scmp.eq.s32.totalorder %s26, 1
      %p60 = por %p58, %p59
      %p61 = scmp.ne.s32.totalorder %s52, %s53
      %p62 = scmp.eq.s32.totalorder %s26, 0
      %p63 = por %p61, %p62
      %p64 = scmp.ne.s32.totalorder %s52, %s53
      %p65 = scmp.eq.s32.totalorder %s27, 1
      %p66 = por %p64, %p65
      %p68 = scmp.ne.s32.totalorder %s53, %s67
      %p69 = scmp.eq.s32.totalorder %s27, 0
      %p70 = por %p68, %p69
      %s72 = sadd.s32 %s71, 1
      %p75 = scmp.eq.s32.totalorder %s21, 1
      %p76 = scmp.ne.s32.totalorder %s71, %s73
      %p77 = scmp.eq.s32.totalorder %s21, 0
      %p78 = por %p76, %p77
      %p79 = scmp.ne.s32.totalorder %s71, %s73
      %p80 = scmp.eq.s32.totalorder %s26, 1
      %p81 = por %p79, %p80
      %p82 = scmp.ne.s32.totalorder %s73, %s74
      %p83 = scmp.eq.s32.totalorder %s26, 0
      %p84 = por %p82, %p83
      %p85 = scmp.ne.s32.totalorder %s73, %s74
      %p86 = scmp.eq.s32.totalorder %s27, 1
      %p87 = por %p85, %p86
      %p89 = scmp.ne.s32.totalorder %s74, %s88
      %p90 = scmp.eq.s32.totalorder %s27, 0
      %p91 = por %p89, %p90
      %s93 = sadd.s32 %s92, 1
      %p96 = scmp.eq.s32.totalorder %s21, 1
      %p97 = scmp.ne.s32.totalorder %s92, %s94
      %p98 = scmp.eq.s32.totalorder %s21, 0
      %p99 = por %p97, %p98
      %p100 = scmp.ne.s32.totalorder %s92, %s94
      %p101 = scmp.eq.s32.totalorder %s26, 1
      %p102 = por %p100, %p101
      %p103 = scmp.ne.s32.totalorder %s94, %s95
      %p104 = scmp.eq.s32.totalorder %s26, 0
      %p105 = por %p103, %p104
      %p106 = scmp.ne.s32.totalorder %s94, %s95
      %p107 = scmp.eq.s32.totalorder %s27, 1
      %p108 = por %p106, %p107
      %p110 = scmp.ne.s32.totalorder %s95, %s109
      %p111 = scmp.eq.s32.totalorder %s27, 0
      %p112 = por %p110, %p111
      %s114 = sadd.s32 %s113, 1
      %p117 = scmp.eq.s32.totalorder %s21, 1
      %p118 = scmp.ne.s32.totalorder %s113, %s115
      %p119 = scmp.eq.s32.totalorder %s21, 0
      %p120 = por %p118, %p119
      %p121 = scmp.ne.s32.totalorder %s113, %s115
      %p122 = scmp.eq.s32.totalorder %s26, 1
      %p123 = por %p121, %p122
      %p124 = scmp.ne.s32.totalorder %s115, %s116
      %p125 = scmp.eq.s32.totalorder %s26, 0
      %p126 = por %p124, %p125
      %p127 = scmp.ne.s32.totalorder %s115, %s116
      %p128 = scmp.eq.s32.totalorder %s27, 1
      %p129 = por %p127, %p128
      %p131 = scmp.ne.s32.totalorder %s116, %s130
      %p132 = scmp.eq.s32.totalorder %s27, 0
      %p133 = por %p131, %p132
      %s134 = ssub.s32 %s21, %s28
      %p135 = scmp.eq.s32.totalorder %s134, 0
      %s137 = sadd.s32 %s136, 1
      %s138 = scalar_select %p135, %s136, %s137
      %p141 = pneg %p135
      %p142 = scmp.eq.s32.totalorder %s21, 1
      %p143 = por %p141, %p142
      %p144 = scmp.ne.s32.totalorder %s136, %s139
      %p145 = scmp.eq.s32.totalorder %s21, 0
      %p146 = por %p144, %p145
      %p147 = scmp.ne.s32.totalorder %s136, %s139
      %p148 = scmp.eq.s32.totalorder %s26, 1
      %p149 = por %p147, %p148
      %p150 = scmp.ne.s32.totalorder %s139, %s140
      %p151 = scmp.eq.s32.totalorder %s26, 0
      %p152 = por %p150, %p151
      %p153 = scmp.ne.s32.totalorder %s139, %s140
      %p154 = scmp.eq.s32.totalorder %s27, 1
      %p155 = por %p153, %p154
      %p157 = scmp.ne.s32.totalorder %s140, %s156
      %p158 = scmp.eq.s32.totalorder %s27, 0
      %p159 = por %p157, %p158
      %s160 = ssub.s32 %s21, %s28
      %p161 = scmp.eq.s32.totalorder %s160, 0
      %s163 = sadd.s32 %s162, 1
      %s164 = scalar_select %p161, %s162, %s163
      %p167 = pneg %p161
      %p168 = scmp.eq.s32.totalorder %s21, 1
      %p169 = por %p167, %p168
      %p170 = scmp.ne.s32.totalorder %s162, %s165
      %p171 = scmp.eq.s32.totalorder %s21, 0
      %p172 = por %p170, %p171
      %p173 = scmp.ne.s32.totalorder %s162, %s165
      %p174 = scmp.eq.s32.totalorder %s26, 1
      %p175 = por %p173, %p174
      %p176 = scmp.ne.s32.totalorder %s165, %s166
      %p177 = scmp.eq.s32.totalorder %s26, 0
      %p178 = por %p176, %p177
      %p179 = scmp.ne.s32.totalorder %s165, %s166
      %p180 = scmp.eq.s32.totalorder %s27, 1
      %p181 = por %p179, %p180
      %p183 = scmp.ne.s32.totalorder %s166, %s182
      %p184 = scmp.eq.s32.totalorder %s27, 0
      %p185 = por %p183, %p184
      %s186 = ssub.s32 %s21, %s28
      %p187 = scmp.eq.s32.totalorder %s186, 0
      %s189 = sadd.s32 %s188, 1
      %s190 = scalar_select %p187, %s188, %s189
      %p193 = pneg %p187
      %p194 = scmp.eq.s32.totalorder %s21, 1
      %p195 = por %p193, %p194
      %p196 = scmp.ne.s32.totalorder %s188, %s191
      %p197 = scmp.eq.s32.totalorder %s21, 0
      %p198 = por %p196, %p197
      %p199 = scmp.ne.s32.totalorder %s188, %s191
      %p200 = scmp.eq.s32.totalorder %s26, 1
      %p201 = por %p199, %p200
      %p202 = scmp.ne.s32.totalorder %s191, %s192
      %p203 = scmp.eq.s32.totalorder %s26, 0
      %p204 = por %p202, %p203
      %p205 = scmp.ne.s32.totalorder %s191, %s192
      %p206 = scmp.eq.s32.totalorder %s27, 1
      %p207 = por %p205, %p206
      %p209 = scmp.ne.s32.totalorder %s192, %s208
      %p210 = scmp.eq.s32.totalorder %s27, 0
      %p211 = por %p209, %p210
      %s212 = ssub.s32 %s21, %s28
      %p213 = scmp.eq.s32.totalorder %s212, 0
      %s215 = sadd.s32 %s214, 1
      %s216 = scalar_select %p213, %s214, %s215
      %p219 = pneg %p213
      %p220 = scmp.eq.s32.totalorder %s21, 1
      %p221 = por %p219, %p220
      %p222 = scmp.ne.s32.totalorder %s214, %s217
      %p223 = scmp.eq.s32.totalorder %s21, 0
      %p224 = por %p222, %p223
      %p225 = scmp.ne.s32.totalorder %s214, %s217
      %p226 = scmp.eq.s32.totalorder %s26, 1
      %p227 = por %p225, %p226
      %p228 = scmp.ne.s32.totalorder %s217, %s218
      %p229 = scmp.eq.s32.totalorder %s26, 0
      %p230 = por %p228, %p229
      %p231 = scmp.ne.s32.totalorder %s217, %s218
      %p232 = scmp.eq.s32.totalorder %s27, 1
      %p233 = por %p231, %p232
      %p235 = scmp.ne.s32.totalorder %s218, %s234
      %p236 = scmp.eq.s32.totalorder %s27, 0
      %p237 = por %p235, %p236
      %s239 = sadd.s32 %s238, 1
      %p242 = scmp.eq.s32.totalorder %s21, 1
      %p243 = scmp.ne.s32.totalorder %s238, %s240
      %p244 = scmp.eq.s32.totalorder %s21, 0
      %p245 = por %p243, %p244
      %p246 = scmp.ne.s32.totalorder %s238, %s240
      %p247 = scmp.eq.s32.totalorder %s26, 1
      %p248 = por %p246, %p247
      %p249 = scmp.ne.s32.totalorder %s240, %s241
      %p250 = scmp.eq.s32.totalorder %s26, 0
      %p251 = por %p249, %p250
      %p252 = scmp.ne.s32.totalorder %s240, %s241
      %p253 = scmp.eq.s32.totalorder %s27, 1
      %p254 = por %p252, %p253
      %p256 = scmp.ne.s32.totalorder %s241, %s255
      %p257 = scmp.eq.s32.totalorder %s27, 0
      %p258 = por %p256, %p257
      %s260 = sadd.s32 %s259, 1
      %p263 = scmp.eq.s32.totalorder %s21, 1
      %p264 = scmp.ne.s32.totalorder %s259, %s261
      %p265 = scmp.eq.s32.totalorder %s21, 0
      %p266 = por %p264, %p265
      %p267 = scmp.ne.s32.totalorder %s259, %s261
      %p268 = scmp.eq.s32.totalorder %s26, 1
      %p269 = por %p267, %p268
      %p270 = scmp.ne.s32.totalorder %s261, %s262
      %p271 = scmp.eq.s32.totalorder %s26, 0
      %p272 = por %p270, %p271
      %p273 = scmp.ne.s32.totalorder %s261, %s262
      %p274 = scmp.eq.s32.totalorder %s27, 1
      %p275 = por %p273, %p274
      %p277 = scmp.ne.s32.totalorder %s262, %s276
      %p278 = scmp.eq.s32.totalorder %s27, 0
      %p279 = por %p277, %p278
      %p280 = scmp.le.s32.totalorder 1, %s21
      %p281 = scmp.lt.s32.totalorder %s21, 3
      %p282 = pnand %p280, %p281
      %p283 = pneg %p282
      // Predicated region
      $region9: #{encoder2_forward.1} parent=5 // pred_check
        _
      $region10: #{encoder2_forward.1} parent=5 // pred_check_branch
        %285 = sbr.rel (%p282) target = $region12
      $region11: #{encoder2_forward.1} parent=5 // pred_region
        %s286 = ssub.s32 %s21, 1
        // Predicated region
        $region13: #{encoder2_forward.1} parent=11 // pred_check
          %p287 = pneg %p42
        $region14: #{encoder2_forward.1} parent=11 // pred_check_branch
          %289 = sbr.rel (%p287) target = $region16
        $region15: #{encoder2_forward.1} parent=11 // pred_region
          _
        $region16: #{encoder2_forward.1} parent=11 // pred_fallthru
          _
        // Predicated region
        $region17: #{encoder2_forward.1} parent=11 // pred_check
          %p290 = pneg %p63
        $region18: #{encoder2_forward.1} parent=11 // pred_check_branch
          %292 = sbr.rel (%p290) target = $region20
        $region19: #{encoder2_forward.1} parent=11 // pred_region
          %s294 = ssub.s32 16, 16
          %295 = vsyncadd [#allocation5], %s294
          %s297 = sshll.u32 %s1, 4
          %s298 = int_to_ptr.vmem [resolvable:$true] %s297
          %300 = dma.vmem_to_smem %s298, 16, [#allocation3], [#allocation5]
        $region20: #{encoder2_forward.1} parent=11 // pred_fallthru
          _
        // Predicated region
        $region21: #{encoder2_forward.1} parent=11 // pred_check
          %p301 = pneg %p84
        $region22: #{encoder2_forward.1} parent=11 // pred_check_branch
          %303 = sbr.rel (%p301) target = $region24
        $region23: #{encoder2_forward.1} parent=11 // pred_region
          %s305 = ssub.s32 16, 16
          %306 = vsyncadd [#allocation7], %s305
          %s308 = sshll.u32 %s2, 4
          %s309 = int_to_ptr.vmem [resolvable:$true] %s308
          %311 = dma.vmem_to_smem %s309, 16, [#allocation6], [#allocation7]
        $region24: #{encoder2_forward.1} parent=11 // pred_fallthru
          _
        // Predicated region
        $region25: #{encoder2_forward.1} parent=11 // pred_check
          %p312 = pneg %p105
        $region26: #{encoder2_forward.1} parent=11 // pred_check_branch
          %314 = sbr.rel (%p312) target = $region28
        $region27: #{encoder2_forward.1} parent=11 // pred_region
          _
        $region28: #{encoder2_forward.1} parent=11 // pred_fallthru
          _
        // Predicated region
        $region29: #{encoder2_forward.1} parent=11 // pred_check
          %p315 = pneg %p126
        $region30: #{encoder2_forward.1} parent=11 // pred_check_branch
          %317 = sbr.rel (%p315) target = $region32
        $region31: #{encoder2_forward.1} parent=11 // pred_region
          _
        $region32: #{encoder2_forward.1} parent=11 // pred_fallthru
          _
      $region12: #{encoder2_forward.1} parent=5 // pred_fallthru
        _
      %p318 = scmp.lt.s32.totalorder %s21, 2
      // Predicated region
      $region33: #{encoder2_forward.1} parent=5 // pred_check
        %p319 = pneg %p318
      $region34: #{encoder2_forward.1} parent=5 // pred_check_branch
        %321 = sbr.rel (%p319) target = $region36
      $region35: #{encoder2_forward.1} parent=5 // pred_region
        // Predicated region
        $region37: #{encoder2_forward.1} parent=35 // pred_check
          %p322 = pneg %p146
        $region38: #{encoder2_forward.1} parent=35 // pred_check_branch
          %324 = sbr.rel (%p322) target = $region40
        $region39: #{encoder2_forward.1} parent=35 // pred_region
          %p325 = scmp.lt.s32.totalorder %s21, 1
          %s326 = scalar_select %p325, %s21, 1
          %s327 = smul.addr %s326, 16
          %s328 = smul.addr %s327, 8
          %s329 = scalar_lea.vmem %s5, %s328
        $region40: #{encoder2_forward.1} parent=35 // pred_fallthru
          _
        // Predicated region
        $region41: #{encoder2_forward.1} parent=35 // pred_check
          %p330 = pneg %p172
        $region42: #{encoder2_forward.1} parent=35 // pred_check_branch
          %332 = sbr.rel (%p330) target = $region44
        $region43: #{encoder2_forward.1} parent=35 // pred_region
          %p333 = scmp.lt.s32.totalorder %s21, 1
          %s334 = scalar_select %p333, %s21, 1
          %s335 = scalar_lea.vmem %s6, %s334
        $region44: #{encoder2_forward.1} parent=35 // pred_fallthru
          _
        // Predicated region
        $region45: #{encoder2_forward.1} parent=35 // pred_check
          %p336 = pneg %p198
        $region46: #{encoder2_forward.1} parent=35 // pred_check_branch
          %338 = sbr.rel (%p336) target = $region48
        $region47: #{encoder2_forward.1} parent=35 // pred_region
          %p339 = scmp.lt.s32.totalorder %s21, 1
          %s340 = scalar_select %p339, %s21, 1
          %s341 = scalar_lea.vmem %s7, %s340
        $region48: #{encoder2_forward.1} parent=35 // pred_fallthru
          _
        // Predicated region
        $region49: #{encoder2_forward.1} parent=35 // pred_check
          %p342 = pneg %p224
        $region50: #{encoder2_forward.1} parent=35 // pred_check_branch
          %344 = sbr.rel (%p342) target = $region52
        $region51: #{encoder2_forward.1} parent=35 // pred_region
          %p345 = scmp.lt.s32.totalorder %s21, 1
          %s346 = scalar_select %p345, %s21, 1
          %s347 = scalar_lea.vmem %s8, %s346
        $region52: #{encoder2_forward.1} parent=35 // pred_fallthru
          _
      $region36: #{encoder2_forward.1} parent=5 // pred_fallthru
        _
      %p348 = scmp.le.s32.totalorder 1, %s21
      %p349 = scmp.lt.s32.totalorder %s21, 3
      %p350 = pnand %p348, %p349
      %p351 = pneg %p350
      // Predicated region
      $region53: #{encoder2_forward.1} parent=5 // pred_check
        _
      $region54: #{encoder2_forward.1} parent=5 // pred_check_branch
        %353 = sbr.rel (%p350) target = $region56
      $region55: #{encoder2_forward.1} parent=5 // pred_region
        %s354 = ssub.s32 %s21, 1
        // Predicated region
        $region57: #{encoder2_forward.1} parent=55 // pred_check
          %p355 = pneg %p63
        $region58: #{encoder2_forward.1} parent=55 // pred_check_branch
          %357 = sbr.rel (%p355) target = $region60
        $region59: #{encoder2_forward.1} parent=55 // pred_region
          %358 = dma.done [#allocation5], 16
        $region60: #{encoder2_forward.1} parent=55 // pred_fallthru
          _
        // Predicated region
        $region61: #{encoder2_forward.1} parent=55 // pred_check
          %p359 = pneg %p84
        $region62: #{encoder2_forward.1} parent=55 // pred_check_branch
          %361 = sbr.rel (%p359) target = $region64
        $region63: #{encoder2_forward.1} parent=55 // pred_region
          %362 = dma.done [#allocation7], 16
        $region64: #{encoder2_forward.1} parent=55 // pred_fallthru
          _
        %363 = sfence
        %p364 = pneg %p42
        %p365 = pneg %p39
        %p366 = pneg %p63
        %p367 = pneg %p60
        %p368 = pneg %p84
        %p369 = pneg %p81
        %p370 = pneg %p105
        %p371 = pneg %p102
        %p372 = pneg %p126
        %p373 = pneg %p123
        %p374 = scmp.lt.s32.totalorder %s26, 1
        %s375 = scalar_select %p374, %s26, 1
        %s376 = smul.addr %s375, 16
        %s377 = smul.addr %s376, 8
        %s378 = scalar_lea.vmem %s5, %s377
        %p379 = pneg %p152
        %p380 = pneg %p149
        %p381 = scmp.lt.s32.totalorder %s26, 1
        %s382 = scalar_select %p381, %s26, 1
        %s383 = scalar_lea.vmem %s6, %s382
        %p384 = pneg %p178
        %p385 = pneg %p175
        %p386 = scmp.lt.s32.totalorder %s26, 1
        %s387 = scalar_select %p386, %s26, 1
        %s388 = scalar_lea.vmem %s7, %s387
        %p389 = pneg %p204
        %p390 = pneg %p201
        %p391 = scmp.lt.s32.totalorder %s26, 1
        %s392 = scalar_select %p391, %s26, 1
        %s393 = scalar_lea.vmem %s8, %s392
        %p394 = pneg %p230
        %p395 = pneg %p227
        %p396 = pneg %p251
        %p397 = pneg %p248
        %p398 = pneg %p272
        %p399 = pneg %p269
        %p400 = scmp.lt.s32.totalorder %s26, 1
        %s401 = scalar_select %p400, %s26, 1
        %s402 = smul.addr %s401, 16
        %s403 = smul.addr %s402, 8
        %s404 = scalar_lea.vmem %s5, %s403
        %p405 = scmp.lt.s32.totalorder %s26, 1
        %s406 = scalar_select %p405, %s26, 1
        %s407 = scalar_lea.vmem %s6, %s406
        %p408 = scmp.lt.s32.totalorder %s26, 1
        %s409 = scalar_select %p408, %s26, 1
        %s410 = scalar_lea.vmem %s7, %s409
        %p411 = scmp.lt.s32.totalorder %s26, 1
        %s412 = scalar_select %p411, %s26, 1
        %s413 = scalar_lea.vmem %s8, %s412
        %p415 = scmp.eq.s32.totalorder %s26, 0
        // Predicated region
        $region65: #{encoder2_forward.1} parent=55 // pred_check
          %p416 = pneg %p415
        $region66: #{encoder2_forward.1} parent=55 // pred_check_branch
          %418 = sbr.rel (%p416) target = $region68
        $region67: #{encoder2_forward.1} parent=55 // pred_region
          %v419 = vld [vmem:[%s4] sm:$0xff]
          %v420 = vld [vmem:[%s4 + $0x8] sm:$0xff]
          %v421 = vld [vmem:[%s4 + $0x10] sm:$0xff]
          %v422 = vld [vmem:[%s4 + $0x18] sm:$0xff]
          %v423 = vld [vmem:[%s4 + $0x20] sm:$0xff]
          %v424 = vld [vmem:[%s4 + $0x28] sm:$0xff]
          %v425 = vld [vmem:[%s4 + $0x30] sm:$0xff]
          %v426 = vld [vmem:[%s4 + $0x38] sm:$0xff]
          %v427 = vld [vmem:[%s4 + $0x40] sm:$0xff]
          %v428 = vld [vmem:[%s4 + $0x48] sm:$0xff]
          %v429 = vld [vmem:[%s4 + $0x50] sm:$0xff]
          %v430 = vld [vmem:[%s4 + $0x58] sm:$0xff]
          %v431 = vld [vmem:[%s4 + $0x60] sm:$0xff]
          %v432 = vld [vmem:[%s4 + $0x68] sm:$0xff]
          %v433 = vld [vmem:[%s4 + $0x70] sm:$0xff]
          %v434 = vld [vmem:[%s4 + $0x78] sm:$0xff]
          %435 = vst [vmem:[%s9] sm:$0xff] %v419
          %436 = vst [vmem:[%s9 + $0x8] sm:$0xff] %v420
          %437 = vst [vmem:[%s9 + $0x10] sm:$0xff] %v421
          %438 = vst [vmem:[%s9 + $0x18] sm:$0xff] %v422
          %439 = vst [vmem:[%s9 + $0x20] sm:$0xff] %v423
          %440 = vst [vmem:[%s9 + $0x28] sm:$0xff] %v424
          %441 = vst [vmem:[%s9 + $0x30] sm:$0xff] %v425
          %442 = vst [vmem:[%s9 + $0x38] sm:$0xff] %v426
          %443 = vst [vmem:[%s9 + $0x40] sm:$0xff] %v427
          %444 = vst [vmem:[%s9 + $0x48] sm:$0xff] %v428
          %445 = vst [vmem:[%s9 + $0x50] sm:$0xff] %v429
          %446 = vst [vmem:[%s9 + $0x58] sm:$0xff] %v430
          %447 = vst [vmem:[%s9 + $0x60] sm:$0xff] %v431
          %448 = vst [vmem:[%s9 + $0x68] sm:$0xff] %v432
          %449 = vst [vmem:[%s9 + $0x70] sm:$0xff] %v433
          %450 = vst [vmem:[%s9 + $0x78] sm:$0xff] %v434
          %451 = vst [vmem:[#allocation8] sm:$0x1] 0.0
        $region68: #{encoder2_forward.1} parent=55 // pred_fallthru
          _
        %v452 = vld [vmem:[%s9] sm:$0xff]
        %v453 = vld [vmem:[%s9 + $0x8] sm:$0xff]
        %v454 = vld [vmem:[%s9 + $0x10] sm:$0xff]
        %v455 = vld [vmem:[%s9 + $0x18] sm:$0xff]
        %v456 = vld [vmem:[%s9 + $0x20] sm:$0xff]
        %v457 = vld [vmem:[%s9 + $0x28] sm:$0xff]
        %v458 = vld [vmem:[%s9 + $0x30] sm:$0xff]
        %v459 = vld [vmem:[%s9 + $0x38] sm:$0xff]
        %v460 = vld [vmem:[%s9 + $0x40] sm:$0xff]
        %v461 = vld [vmem:[%s9 + $0x48] sm:$0xff]
        %v462 = vld [vmem:[%s9 + $0x50] sm:$0xff]
        %v463 = vld [vmem:[%s9 + $0x58] sm:$0xff]
        %v464 = vld [vmem:[%s9 + $0x60] sm:$0xff]
        %v465 = vld [vmem:[%s9 + $0x68] sm:$0xff]
        %v466 = vld [vmem:[%s9 + $0x70] sm:$0xff]
        %v467 = vld [vmem:[%s9 + $0x78] sm:$0xff]
        %v468 = vpack.c.bf16 %v453, %v452
        %v469 = vpack.c.bf16 %v455, %v454
        %v470 = vpack.c.bf16 %v457, %v456
        %v471 = vpack.c.bf16 %v459, %v458
        %v472 = vpack.c.bf16 %v461, %v460
        %v473 = vpack.c.bf16 %v463, %v462
        %v474 = vpack.c.bf16 %v465, %v464
        %v475 = vpack.c.bf16 %v467, %v466
        %v476 = vld [vmem:[%s3] sm:$0xf]
        %v477 = vld [vmem:[%s3 + $0x4] sm:$0xf]
        %v478 = vld [vmem:[%s3 + $0x8] sm:$0xf]
        %v479 = vld [vmem:[%s3 + $0xc] sm:$0xf]
        %v480 = vld [vmem:[%s3 + $0x10] sm:$0xf]
        %v481 = vld [vmem:[%s3 + $0x14] sm:$0xf]
        %v482 = vld [vmem:[%s3 + $0x18] sm:$0xf]
        %v483 = vld [vmem:[%s3 + $0x1c] sm:$0xf]
        %v484 = vld [vmem:[%s3 + $0x20] sm:$0xf]
        %v485 = vld [vmem:[%s3 + $0x24] sm:$0xf]
        %v486 = vld [vmem:[%s3 + $0x28] sm:$0xf]
        %v487 = vld [vmem:[%s3 + $0x2c] sm:$0xf]
        %v488 = vld [vmem:[%s3 + $0x30] sm:$0xf]
        %v489 = vld [vmem:[%s3 + $0x34] sm:$0xf]
        %v490 = vld [vmem:[%s3 + $0x38] sm:$0xf]
        %v491 = vld [vmem:[%s3 + $0x3c] sm:$0xf]
        %v508 = vunpack.c.l.b16 %v476
        %v509 = vunpack.c.l.b16 %v477
        %v510 = vunpack.c.l.b16 %v478
        %v511 = vunpack.c.l.b16 %v479
        %v512 = vunpack.c.l.b16 %v480
        %v513 = vunpack.c.l.b16 %v481
        %v514 = vunpack.c.l.b16 %v482
        %v515 = vunpack.c.l.b16 %v483
        %v516 = vunpack.c.l.b16 %v484
        %v517 = vunpack.c.l.b16 %v485
        %v518 = vunpack.c.l.b16 %v486
        %v519 = vunpack.c.l.b16 %v487
        %v520 = vunpack.c.l.b16 %v488
        %v521 = vunpack.c.l.b16 %v489
        %v522 = vunpack.c.l.b16 %v490
        %v523 = vunpack.c.l.b16 %v491
        %v524 = vpack.c.b16 %v509, %v508
        %v525 = vpack.c.b16 %v511, %v510
        %v526 = vpack.c.b16 %v513, %v512
        %v527 = vpack.c.b16 %v515, %v514
        %v528 = vpack.c.b16 %v517, %v516
        %v529 = vpack.c.b16 %v519, %v518
        %v530 = vpack.c.b16 %v521, %v520
        %v531 = vpack.c.b16 %v523, %v522
        %540 = vmatprep.subr.bf16.mxu0 0
        %541 = vmatpush1.bf16.msra.mxu0 %v475
        %542 = vmatprep.subr.bf16.mxu0 0
        %543 = vmatpush1.bf16.msra.mxu0 %v474
        %544 = vmatprep.subr.bf16.mxu0 0
        %545 = vmatpush1.bf16.msra.mxu0 %v473
        %546 = vmatprep.subr.bf16.mxu0 0
        %547 = vmatpush1.bf16.msra.mxu0 %v472
        %548 = vmatprep.subr.bf16.mxu0 0
        %549 = vmatpush1.bf16.msra.mxu0 %v471
        %550 = vmatprep.subr.bf16.mxu0 0
        %551 = vmatpush1.bf16.msra.mxu0 %v470
        %552 = vmatprep.subr.bf16.mxu0 0
        %553 = vmatpush1.bf16.msra.mxu0 %v469
        %554 = vmatprep.subr.bf16.mxu0 0
        %555 = vmatpush1.bf16.msra.mxu0 %v468
        %556 = vmatprep.subr.bf16.mxu0 0
        %557 = vmatpush2.bf16.msra.mxu0 0
        %558 = vmatprep.subr.bf16.mxu0 0
        %559 = vmatpush2.bf16.msra.mxu0 0
        %560 = vmatprep.subr.bf16.mxu0 0
        %561 = vmatpush2.bf16.msra.mxu0 0
        %562 = vmatprep.subr.bf16.mxu0 0
        %563 = vmatpush2.bf16.msra.mxu0 0
        %564 = vmatprep.subr.bf16.mxu0 0
        %565 = vmatpush2.bf16.msra.mxu0 0
        %566 = vmatprep.subr.bf16.mxu0 0
        %567 = vmatpush2.bf16.msra.mxu0 0
        %568 = vmatprep.subr.bf16.mxu0 0
        %569 = vmatpush2.bf16.msra.mxu0 0
        %570 = vmatprep.subr.bf16.mxu0 0
        %571 = vmatpush2.bf16.msra.mxu0 0
        %572 = vmatprep.mubr.bf16.mxu0 0
        %573 = vmatmul.mubr.bf16.gmra.mxu0 %v524
        %v574 = vpop.f32.mrf.mxu0
        %v575 = vadd.f32 0.0, %v574
        %v576 = vpop.f32.mrf.mxu0
        %v577 = vpop.f32.mrf.mxu0
        %v578 = vadd.f32 0.0, %v577
        %v579 = vpop.f32.mrf.mxu0
        %580 = vmatprep.mubr.bf16.mxu0 0
        %581 = vmatmul.mubr.bf16.gmra.mxu0 %v525
        %v582 = vpop.f32.mrf.mxu0
        %v583 = vadd.f32 0.0, %v582
        %v584 = vpop.f32.mrf.mxu0
        %v585 = vpop.f32.mrf.mxu0
        %v586 = vadd.f32 0.0, %v585
        %v587 = vpop.f32.mrf.mxu0
        %588 = vmatprep.mubr.bf16.mxu0 0
        %589 = vmatmul.mubr.bf16.gmra.mxu0 %v526
        %v590 = vpop.f32.mrf.mxu0
        %v591 = vadd.f32 0.0, %v590
        %v592 = vpop.f32.mrf.mxu0
        %v593 = vpop.f32.mrf.mxu0
        %v594 = vadd.f32 0.0, %v593
        %v595 = vpop.f32.mrf.mxu0
        %596 = vmatprep.mubr.bf16.mxu0 0
        %597 = vmatmul.mubr.bf16.gmra.mxu0 %v527
        %v598 = vpop.f32.mrf.mxu0
        %v599 = vadd.f32 0.0, %v598
        %v600 = vpop.f32.mrf.mxu0
        %v601 = vpop.f32.mrf.mxu0
        %v602 = vadd.f32 0.0, %v601
        %v603 = vpop.f32.mrf.mxu0
        %604 = vmatprep.mubr.bf16.mxu0 0
        %605 = vmatmul.mubr.bf16.gmra.mxu0 %v528
        %v606 = vpop.f32.mrf.mxu0
        %v607 = vadd.f32 0.0, %v606
        %v608 = vpop.f32.mrf.mxu0
        %v609 = vpop.f32.mrf.mxu0
        %v610 = vadd.f32 0.0, %v609
        %v611 = vpop.f32.mrf.mxu0
        %612 = vmatprep.mubr.bf16.mxu0 0
        %613 = vmatmul.mubr.bf16.gmra.mxu0 %v529
        %v614 = vpop.f32.mrf.mxu0
        %v615 = vadd.f32 0.0, %v614
        %v616 = vpop.f32.mrf.mxu0
        %v617 = vpop.f32.mrf.mxu0
        %v618 = vadd.f32 0.0, %v617
        %v619 = vpop.f32.mrf.mxu0
        %620 = vmatprep.mubr.bf16.mxu0 0
        %621 = vmatmul.mubr.bf16.gmra.mxu0 %v530
        %v622 = vpop.f32.mrf.mxu0
        %v623 = vadd.f32 0.0, %v622
        %v624 = vpop.f32.mrf.mxu0
        %v625 = vpop.f32.mrf.mxu0
        %v626 = vadd.f32 0.0, %v625
        %v627 = vpop.f32.mrf.mxu0
        %628 = vmatprep.mubr.bf16.mxu0 0
        %629 = vmatmul.mubr.bf16.gmra.mxu0 %v531
        %v630 = vpop.f32.mrf.mxu0
        %v631 = vadd.f32 0.0, %v630
        %v632 = vpop.f32.mrf.mxu0
        %v633 = vpop.f32.mrf.mxu0
        %v634 = vadd.f32 0.0, %v633
        %v635 = vpop.f32.mrf.mxu0
        %636 = vdwg.mxu0
        %v637 = vld [vmem:[%s404] sm:$0xff]
        %v638 = vld [vmem:[%s404 + $0x8] sm:$0xff]
        %v639 = vld [vmem:[%s404 + $0x10] sm:$0xff]
        %v640 = vld [vmem:[%s404 + $0x18] sm:$0xff]
        %v641 = vld [vmem:[%s404 + $0x20] sm:$0xff]
        %v642 = vld [vmem:[%s404 + $0x28] sm:$0xff]
        %v643 = vld [vmem:[%s404 + $0x30] sm:$0xff]
        %v644 = vld [vmem:[%s404 + $0x38] sm:$0xff]
        %v645 = vld [vmem:[%s404 + $0x40] sm:$0xff]
        %v646 = vld [vmem:[%s404 + $0x48] sm:$0xff]
        %v647 = vld [vmem:[%s404 + $0x50] sm:$0xff]
        %v648 = vld [vmem:[%s404 + $0x58] sm:$0xff]
        %v649 = vld [vmem:[%s404 + $0x60] sm:$0xff]
        %v650 = vld [vmem:[%s404 + $0x68] sm:$0xff]
        %v651 = vld [vmem:[%s404 + $0x70] sm:$0xff]
        %v652 = vld [vmem:[%s404 + $0x78] sm:$0xff]
        %v653 = vld [vmem:[%s407] sm:$0x1]
        %v655 = vlaneseq
        %v656 = vshrl.u32 %v655, 7
        %v657 = vsub.s32 0, %v656
        %v658 = vrot.slane %v653, %v657
        %660 = vmatprep.subr.mxu0 0.0
        %661 = vmatpush1.msra.mxu0 %v652
        %662 = vmatprep.subr.mxu0 0.0
        %663 = vmatpush1.msra.mxu0 %v651
        %664 = vmatprep.subr.mxu0 0.0
        %665 = vmatpush1.msra.mxu0 %v650
        %666 = vmatprep.subr.mxu0 0.0
        %667 = vmatpush1.msra.mxu0 %v649
        %668 = vmatprep.subr.mxu0 0.0
        %669 = vmatpush1.msra.mxu0 %v648
        %670 = vmatprep.subr.mxu0 0.0
        %671 = vmatpush1.msra.mxu0 %v647
        %672 = vmatprep.subr.mxu0 0.0
        %673 = vmatpush1.msra.mxu0 %v646
        %674 = vmatprep.subr.mxu0 0.0
        %675 = vmatpush1.msra.mxu0 %v645
        %676 = vmatprep.subr.mxu0 0.0
        %677 = vmatpush1.msra.mxu0 %v644
        %678 = vmatprep.subr.mxu0 0.0
        %679 = vmatpush1.msra.mxu0 %v643
        %680 = vmatprep.subr.mxu0 0.0
        %681 = vmatpush1.msra.mxu0 %v642
        %682 = vmatprep.subr.mxu0 0.0
        %683 = vmatpush1.msra.mxu0 %v641
        %684 = vmatprep.subr.mxu0 0.0
        %685 = vmatpush1.msra.mxu0 %v640
        %686 = vmatprep.subr.mxu0 0.0
        %687 = vmatpush1.msra.mxu0 %v639
        %688 = vmatprep.subr.mxu0 0.0
        %689 = vmatpush1.msra.mxu0 %v638
        %690 = vmatprep.subr.mxu0 0.0
        %691 = vmatpush1.msra.mxu0 %v637
        %692 = vmatprep.subr.mxu0 0.0
        %693 = vmatpush2.msra.mxu0 0.0
        %694 = vmatprep.subr.mxu0 0.0
        %695 = vmatpush2.msra.mxu0 0.0
        %696 = vmatprep.subr.mxu0 0.0
        %697 = vmatpush2.msra.mxu0 0.0
        %698 = vmatprep.subr.mxu0 0.0
        %699 = vmatpush2.msra.mxu0 0.0
        %700 = vmatprep.subr.mxu0 0.0
        %701 = vmatpush2.msra.mxu0 0.0
        %702 = vmatprep.subr.mxu0 0.0
        %703 = vmatpush2.msra.mxu0 0.0
        %704 = vmatprep.subr.mxu0 0.0
        %705 = vmatpush2.msra.mxu0 0.0
        %706 = vmatprep.subr.mxu0 0.0
        %707 = vmatpush2.msra.mxu0 0.0
        %708 = vmatprep.subr.mxu0 0.0
        %709 = vmatpush2.msra.mxu0 0.0
        %710 = vmatprep.subr.mxu0 0.0
        %711 = vmatpush2.msra.mxu0 0.0
        %712 = vmatprep.subr.mxu0 0.0
        %713 = vmatpush2.msra.mxu0 0.0
        %714 = vmatprep.subr.mxu0 0.0
        %715 = vmatpush2.msra.mxu0 0.0
        %716 = vmatprep.subr.mxu0 0.0
        %717 = vmatpush2.msra.mxu0 0.0
        %718 = vmatprep.subr.mxu0 0.0
        %719 = vmatpush2.msra.mxu0 0.0
        %720 = vmatprep.subr.mxu0 0.0
        %721 = vmatpush2.msra.mxu0 0.0
        %722 = vmatprep.subr.mxu0 0.0
        %723 = vmatpush2.msra.mxu0 0.0
        %724 = vmatprep.mubr.f32.mxu0 0.0
        %725 = vmatmul.mubr.f32.gmra.mxu0 %v575
        %v726 = vpop.f32.mrf.mxu0
        %v727 = vadd.f32 %v658, %v726
        %v728 = vpop.f32.mrf.mxu0
        %729 = vmatprep.mubr.f32.mxu0 0.0
        %730 = vmatmul.mubr.f32.gmra.mxu0 %v578
        %v731 = vpop.f32.mrf.mxu0
        %v732 = vadd.f32 %v658, %v731
        %v733 = vpop.f32.mrf.mxu0
        %734 = vmatprep.mubr.f32.mxu0 0.0
        %735 = vmatmul.mubr.f32.gmra.mxu0 %v583
        %v736 = vpop.f32.mrf.mxu0
        %v737 = vadd.f32 %v658, %v736
        %v738 = vpop.f32.mrf.mxu0
        %739 = vmatprep.mubr.f32.mxu0 0.0
        %740 = vmatmul.mubr.f32.gmra.mxu0 %v586
        %v741 = vpop.f32.mrf.mxu0
        %v742 = vadd.f32 %v658, %v741
        %v743 = vpop.f32.mrf.mxu0
        %744 = vmatprep.mubr.f32.mxu0 0.0
        %745 = vmatmul.mubr.f32.gmra.mxu0 %v591
        %v746 = vpop.f32.mrf.mxu0
        %v747 = vadd.f32 %v658, %v746
        %v748 = vpop.f32.mrf.mxu0
        %749 = vmatprep.mubr.f32.mxu0 0.0
        %750 = vmatmul.mubr.f32.gmra.mxu0 %v594
        %v751 = vpop.f32.mrf.mxu0
        %v752 = vadd.f32 %v658, %v751
        %v753 = vpop.f32.mrf.mxu0
        %754 = vmatprep.mubr.f32.mxu0 0.0
        %755 = vmatmul.mubr.f32.gmra.mxu0 %v599
        %v756 = vpop.f32.mrf.mxu0
        %v757 = vadd.f32 %v658, %v756
        %v758 = vpop.f32.mrf.mxu0
        %759 = vmatprep.mubr.f32.mxu0 0.0
        %760 = vmatmul.mubr.f32.gmra.mxu0 %v602
        %v761 = vpop.f32.mrf.mxu0
        %v762 = vadd.f32 %v658, %v761
        %v763 = vpop.f32.mrf.mxu0
        %764 = vmatprep.mubr.f32.mxu0 0.0
        %765 = vmatmul.mubr.f32.gmra.mxu0 %v607
        %v766 = vpop.f32.mrf.mxu0
        %v767 = vadd.f32 %v658, %v766
        %v768 = vpop.f32.mrf.mxu0
        %769 = vmatprep.mubr.f32.mxu0 0.0
        %770 = vmatmul.mubr.f32.gmra.mxu0 %v610
        %v771 = vpop.f32.mrf.mxu0
        %v772 = vadd.f32 %v658, %v771
        %v773 = vpop.f32.mrf.mxu0
        %774 = vmatprep.mubr.f32.mxu0 0.0
        %775 = vmatmul.mubr.f32.gmra.mxu0 %v615
        %v776 = vpop.f32.mrf.mxu0
        %v777 = vadd.f32 %v658, %v776
        %v778 = vpop.f32.mrf.mxu0
        %779 = vmatprep.mubr.f32.mxu0 0.0
        %780 = vmatmul.mubr.f32.gmra.mxu0 %v618
        %v781 = vpop.f32.mrf.mxu0
        %v782 = vadd.f32 %v658, %v781
        %v783 = vpop.f32.mrf.mxu0
        %784 = vmatprep.mubr.f32.mxu0 0.0
        %785 = vmatmul.mubr.f32.gmra.mxu0 %v623
        %v786 = vpop.f32.mrf.mxu0
        %v787 = vadd.f32 %v658, %v786
        %v788 = vpop.f32.mrf.mxu0
        %789 = vmatprep.mubr.f32.mxu0 0.0
        %790 = vmatmul.mubr.f32.gmra.mxu0 %v626
        %v791 = vpop.f32.mrf.mxu0
        %v792 = vadd.f32 %v658, %v791
        %v793 = vpop.f32.mrf.mxu0
        %794 = vmatprep.mubr.f32.mxu0 0.0
        %795 = vmatmul.mubr.f32.gmra.mxu0 %v631
        %v796 = vpop.f32.mrf.mxu0
        %v797 = vadd.f32 %v658, %v796
        %v798 = vpop.f32.mrf.mxu0
        %799 = vmatprep.mubr.f32.mxu0 0.0
        %800 = vmatmul.mubr.f32.gmra.mxu0 %v634
        %v801 = vpop.f32.mrf.mxu0
        %v802 = vadd.f32 %v658, %v801
        %v803 = vpop.f32.mrf.mxu0
        %804 = vdwg.mxu0
        %s805 = sld [smem:[#allocation3 + %s26]]
        %vm806 = vcmp.gt.f32.partialorder %v727, 0.0
        %vm807 = vcmp.gt.f32.partialorder %v732, 0.0
        %vm808 = vcmp.gt.f32.partialorder %v737, 0.0
        %vm809 = vcmp.gt.f32.partialorder %v742, 0.0
        %vm810 = vcmp.gt.f32.partialorder %v747, 0.0
        %vm811 = vcmp.gt.f32.partialorder %v752, 0.0
        %vm812 = vcmp.gt.f32.partialorder %v757, 0.0
        %vm813 = vcmp.gt.f32.partialorder %v762, 0.0
        %vm814 = vcmp.gt.f32.partialorder %v767, 0.0
        %vm815 = vcmp.gt.f32.partialorder %v772, 0.0
        %vm816 = vcmp.gt.f32.partialorder %v777, 0.0
        %vm817 = vcmp.gt.f32.partialorder %v782, 0.0
        %vm818 = vcmp.gt.f32.partialorder %v787, 0.0
        %vm819 = vcmp.gt.f32.partialorder %v792, 0.0
        %vm820 = vcmp.gt.f32.partialorder %v797, 0.0
        %vm821 = vcmp.gt.f32.partialorder %v802, 0.0
        %v822 = vstv %s805
        %v823 = vmul.f32 %v822, %v727
        %v824 = vmul.f32 %v822, %v732
        %v825 = vmul.f32 %v822, %v737
        %v826 = vmul.f32 %v822, %v742
        %v827 = vmul.f32 %v822, %v747
        %v828 = vmul.f32 %v822, %v752
        %v829 = vmul.f32 %v822, %v757
        %v830 = vmul.f32 %v822, %v762
        %v831 = vmul.f32 %v822, %v767
        %v832 = vmul.f32 %v822, %v772
        %v833 = vmul.f32 %v822, %v777
        %v834 = vmul.f32 %v822, %v782
        %v835 = vmul.f32 %v822, %v787
        %v836 = vmul.f32 %v822, %v792
        %v837 = vmul.f32 %v822, %v797
        %v838 = vmul.f32 %v822, %v802
        %v839 = vsel %vm806, %v727, %v823
        %v840 = vsel %vm807, %v732, %v824
        %v841 = vsel %vm808, %v737, %v825
        %v842 = vsel %vm809, %v742, %v826
        %v843 = vsel %vm810, %v747, %v827
        %v844 = vsel %vm811, %v752, %v828
        %v845 = vsel %vm812, %v757, %v829
        %v846 = vsel %vm813, %v762, %v830
        %v847 = vsel %vm814, %v767, %v831
        %v848 = vsel %vm815, %v772, %v832
        %v849 = vsel %vm816, %v777, %v833
        %v850 = vsel %vm817, %v782, %v834
        %v851 = vsel %vm818, %v787, %v835
        %v852 = vsel %vm819, %v792, %v836
        %v853 = vsel %vm820, %v797, %v837
        %v854 = vsel %vm821, %v802, %v838
        %s855 = sld [smem:[#allocation2]]
        %v856 = vlaneseq
        %v857 = vshrl.u32 %v856, 7
        %v858 = vadd.s32 %v857, 8
        %v859 = vadd.s32 %v857, 16
        %v860 = vadd.s32 %v857, 24
        %v861 = vadd.s32 %v857, 32
        %v862 = vadd.s32 %v857, 40
        %v863 = vadd.s32 %v857, 48
        %v864 = vadd.s32 %v857, 56
        %v865 = vadd.s32 %v857, 64
        %v866 = vadd.s32 %v857, 72
        %v867 = vadd.s32 %v857, 80
        %v868 = vadd.s32 %v857, 88
        %v869 = vadd.s32 %v857, 96
        %v870 = vadd.s32 %v857, 104
        %v871 = vadd.s32 %v857, 112
        %v872 = vadd.s32 %v857, 120
        %v873 = vstv %s855
        %vm874 = vcmp.lt.s32.totalorder %v857, %v873
        %vm875 = vcmp.lt.s32.totalorder %v858, %v873
        %vm876 = vcmp.lt.s32.totalorder %v859, %v873
        %vm877 = vcmp.lt.s32.totalorder %v860, %v873
        %vm878 = vcmp.lt.s32.totalorder %v861, %v873
        %vm879 = vcmp.lt.s32.totalorder %v862, %v873
        %vm880 = vcmp.lt.s32.totalorder %v863, %v873
        %vm881 = vcmp.lt.s32.totalorder %v864, %v873
        %vm882 = vcmp.lt.s32.totalorder %v865, %v873
        %vm883 = vcmp.lt.s32.totalorder %v866, %v873
        %vm884 = vcmp.lt.s32.totalorder %v867, %v873
        %vm885 = vcmp.lt.s32.totalorder %v868, %v873
        %vm886 = vcmp.lt.s32.totalorder %v869, %v873
        %vm887 = vcmp.lt.s32.totalorder %v870, %v873
        %vm888 = vcmp.lt.s32.totalorder %v871, %v873
        %vm889 = vcmp.lt.s32.totalorder %v872, %v873
        %v890 = vsel %vm874, %v839, 0.0
        %v891 = vsel %vm875, %v840, 0.0
        %v892 = vsel %vm876, %v841, 0.0
        %v893 = vsel %vm877, %v842, 0.0
        %v894 = vsel %vm878, %v843, 0.0
        %v895 = vsel %vm879, %v844, 0.0
        %v896 = vsel %vm880, %v845, 0.0
        %v897 = vsel %vm881, %v846, 0.0
        %v898 = vsel %vm882, %v847, 0.0
        %v899 = vsel %vm883, %v848, 0.0
        %v900 = vsel %vm884, %v849, 0.0
        %v901 = vsel %vm885, %v850, 0.0
        %v902 = vsel %vm886, %v851, 0.0
        %v903 = vsel %vm887, %v852, 0.0
        %v904 = vsel %vm888, %v853, 0.0
        %v905 = vsel %vm889, %v854, 0.0
        %s906 = scvt.s32.f32 %s855
        %v907 = vstv %s906
        %v908 = vrcp.pop %v907
        %s909 = vtos %v908
        %v910 = vadd.f32 %v890, %v891
        %v911 = vadd.f32 %v910, %v892
        %v912 = vadd.f32 %v911, %v893
        %v913 = vadd.f32 %v912, %v894
        %v914 = vadd.f32 %v913, %v895
        %v915 = vadd.f32 %v914, %v896
        %v916 = vadd.f32 %v915, %v897
        %v917 = vadd.f32 %v916, %v898
        %v918 = vadd.f32 %v917, %v899
        %v919 = vadd.f32 %v918, %v900
        %v920 = vadd.f32 %v919, %v901
        %v921 = vadd.f32 %v920, %v902
        %v922 = vadd.f32 %v921, %v903
        %v923 = vadd.f32 %v922, %v904
        %v924 = vadd.f32 %v923, %v905
        %v925 = vrot.slane %v924, 4
        %v926 = vadd.f32 %v924, %v925
        %v927 = vrot.slane %v926, 2
        %v928 = vadd.f32 %v926, %v927
        %v929 = vrot.slane %v928, 1
        %v930 = vadd.f32 %v928, %v929
        %v931 = vstv %s909
        %v932 = vmul.f32 %v930, %v931
        %v933 = vmul.f32 %v890, %v890
        %v934 = vmul.f32 %v891, %v891
        %v935 = vmul.f32 %v892, %v892
        %v936 = vmul.f32 %v893, %v893
        %v937 = vmul.f32 %v894, %v894
        %v938 = vmul.f32 %v895, %v895
        %v939 = vmul.f32 %v896, %v896
        %v940 = vmul.f32 %v897, %v897
        %v941 = vmul.f32 %v898, %v898
        %v942 = vmul.f32 %v899, %v899
        %v943 = vmul.f32 %v900, %v900
        %v944 = vmul.f32 %v901, %v901
        %v945 = vmul.f32 %v902, %v902
        %v946 = vmul.f32 %v903, %v903
        %v947 = vmul.f32 %v904, %v904
        %v948 = vmul.f32 %v905, %v905
        %v949 = vadd.f32 %v933, %v934
        %v950 = vadd.f32 %v949, %v935
        %v951 = vadd.f32 %v950, %v936
        %v952 = vadd.f32 %v951, %v937
        %v953 = vadd.f32 %v952, %v938
        %v954 = vadd.f32 %v953, %v939
        %v955 = vadd.f32 %v954, %v940
        %v956 = vadd.f32 %v955, %v941
        %v957 = vadd.f32 %v956, %v942
        %v958 = vadd.f32 %v957, %v943
        %v959 = vadd.f32 %v958, %v944
        %v960 = vadd.f32 %v959, %v945
        %v961 = vadd.f32 %v960, %v946
        %v962 = vadd.f32 %v961, %v947
        %v963 = vadd.f32 %v962, %v948
        %v964 = vrot.slane %v963, 4
        %v965 = vadd.f32 %v963, %v964
        %v966 = vrot.slane %v965, 2
        %v967 = vadd.f32 %v965, %v966
        %v968 = vrot.slane %v967, 1
        %v969 = vadd.f32 %v967, %v968
        %v970 = vmul.f32 %v969, %v931
        %v971 = vmul.f32 %v932, %v932
        %v972 = vsub.f32 %v970, %v971
        %v973 = vmax.f32 %v972, 0.0
        %v974 = vsub.f32 %v839, %v932
        %v975 = vsub.f32 %v840, %v932
        %v976 = vsub.f32 %v841, %v932
        %v977 = vsub.f32 %v842, %v932
        %v978 = vsub.f32 %v843, %v932
        %v979 = vsub.f32 %v844, %v932
        %v980 = vsub.f32 %v845, %v932
        %v981 = vsub.f32 %v846, %v932
        %v982 = vsub.f32 %v847, %v932
        %v983 = vsub.f32 %v848, %v932
        %v984 = vsub.f32 %v849, %v932
        %v985 = vsub.f32 %v850, %v932
        %v986 = vsub.f32 %v851, %v932
        %v987 = vsub.f32 %v852, %v932
        %v988 = vsub.f32 %v853, %v932
        %v989 = vsub.f32 %v854, %v932
        %v990 = vadd.f32 %v973, 1e-05
        %v991 = vrsqrt.pop %v990
        %v992 = vmul.f32 %v974, %v991
        %v993 = vmul.f32 %v975, %v991
        %v994 = vmul.f32 %v976, %v991
        %v995 = vmul.f32 %v977, %v991
        %v996 = vmul.f32 %v978, %v991
        %v997 = vmul.f32 %v979, %v991
        %v998 = vmul.f32 %v980, %v991
        %v999 = vmul.f32 %v981, %v991
        %v1000 = vmul.f32 %v982, %v991
        %v1001 = vmul.f32 %v983, %v991
        %v1002 = vmul.f32 %v984, %v991
        %v1003 = vmul.f32 %v985, %v991
        %v1004 = vmul.f32 %v986, %v991
        %v1005 = vmul.f32 %v987, %v991
        %v1006 = vmul.f32 %v988, %v991
        %v1007 = vmul.f32 %v989, %v991
        %v1008 = vld [vmem:[%s410] sm:$0x1]
        %v1010 = vlaneseq
        %v1011 = vshrl.u32 %v1010, 7
        %v1012 = vsub.s32 0, %v1011
        %v1013 = vrot.slane %v1008, %v1012
        %v1015 = vmul.f32 %v992, %v1013
        %v1016 = vmul.f32 %v993, %v1013
        %v1017 = vmul.f32 %v994, %v1013
        %v1018 = vmul.f32 %v995, %v1013
        %v1019 = vmul.f32 %v996, %v1013
        %v1020 = vmul.f32 %v997, %v1013
        %v1021 = vmul.f32 %v998, %v1013
        %v1022 = vmul.f32 %v999, %v1013
        %v1023 = vmul.f32 %v1000, %v1013
        %v1024 = vmul.f32 %v1001, %v1013
        %v1025 = vmul.f32 %v1002, %v1013
        %v1026 = vmul.f32 %v1003, %v1013
        %v1027 = vmul.f32 %v1004, %v1013
        %v1028 = vmul.f32 %v1005, %v1013
        %v1029 = vmul.f32 %v1006, %v1013
        %v1030 = vmul.f32 %v1007, %v1013
        %v1031 = vld [vmem:[%s413] sm:$0x1]
        %v1033 = vlaneseq
        %v1034 = vshrl.u32 %v1033, 7
        %v1035 = vsub.s32 0, %v1034
        %v1036 = vrot.slane %v1031, %v1035
        %v1038 = vadd.f32 %v1015, %v1036
        %v1039 = vadd.f32 %v1016, %v1036
        %v1040 = vadd.f32 %v1017, %v1036
        %v1041 = vadd.f32 %v1018, %v1036
        %v1042 = vadd.f32 %v1019, %v1036
        %v1043 = vadd.f32 %v1020, %v1036
        %v1044 = vadd.f32 %v1021, %v1036
        %v1045 = vadd.f32 %v1022, %v1036
        %v1046 = vadd.f32 %v1023, %v1036
        %v1047 = vadd.f32 %v1024, %v1036
        %v1048 = vadd.f32 %v1025, %v1036
        %v1049 = vadd.f32 %v1026, %v1036
        %v1050 = vadd.f32 %v1027, %v1036
        %v1051 = vadd.f32 %v1028, %v1036
        %v1052 = vadd.f32 %v1029, %v1036
        %v1053 = vadd.f32 %v1030, %v1036
        %s1054 = sld [smem:[#allocation6 + %s26]]
        %vm1055 = vcmp.gt.f32.partialorder %v1038, 0.0
        %vm1056 = vcmp.gt.f32.partialorder %v1039, 0.0
        %vm1057 = vcmp.gt.f32.partialorder %v1040, 0.0
        %vm1058 = vcmp.gt.f32.partialorder %v1041, 0.0
        %vm1059 = vcmp.gt.f32.partialorder %v1042, 0.0
        %vm1060 = vcmp.gt.f32.partialorder %v1043, 0.0
        %vm1061 = vcmp.gt.f32.partialorder %v1044, 0.0
        %vm1062 = vcmp.gt.f32.partialorder %v1045, 0.0
        %vm1063 = vcmp.gt.f32.partialorder %v1046, 0.0
        %vm1064 = vcmp.gt.f32.partialorder %v1047, 0.0
        %vm1065 = vcmp.gt.f32.partialorder %v1048, 0.0
        %vm1066 = vcmp.gt.f32.partialorder %v1049, 0.0
        %vm1067 = vcmp.gt.f32.partialorder %v1050, 0.0
        %vm1068 = vcmp.gt.f32.partialorder %v1051, 0.0
        %vm1069 = vcmp.gt.f32.partialorder %v1052, 0.0
        %vm1070 = vcmp.gt.f32.partialorder %v1053, 0.0
        %v1071 = vstv %s1054
        %v1072 = vmul.f32 %v1071, %v1038
        %v1073 = vmul.f32 %v1071, %v1039
        %v1074 = vmul.f32 %v1071, %v1040
        %v1075 = vmul.f32 %v1071, %v1041
        %v1076 = vmul.f32 %v1071, %v1042
        %v1077 = vmul.f32 %v1071, %v1043
        %v1078 = vmul.f32 %v1071, %v1044
        %v1079 = vmul.f32 %v1071, %v1045
        %v1080 = vmul.f32 %v1071, %v1046
        %v1081 = vmul.f32 %v1071, %v1047
        %v1082 = vmul.f32 %v1071, %v1048
        %v1083 = vmul.f32 %v1071, %v1049
        %v1084 = vmul.f32 %v1071, %v1050
        %v1085 = vmul.f32 %v1071, %v1051
        %v1086 = vmul.f32 %v1071, %v1052
        %v1087 = vmul.f32 %v1071, %v1053
        %v1088 = vsel %vm1055, %v1038, %v1072
        %v1089 = vsel %vm1056, %v1039, %v1073
        %v1090 = vsel %vm1057, %v1040, %v1074
        %v1091 = vsel %vm1058, %v1041, %v1075
        %v1092 = vsel %vm1059, %v1042, %v1076
        %v1093 = vsel %vm1060, %v1043, %v1077
        %v1094 = vsel %vm1061, %v1044, %v1078
        %v1095 = vsel %vm1062, %v1045, %v1079
        %v1096 = vsel %vm1063, %v1046, %v1080
        %v1097 = vsel %vm1064, %v1047, %v1081
        %v1098 = vsel %vm1065, %v1048, %v1082
        %v1099 = vsel %vm1066, %v1049, %v1083
        %v1100 = vsel %vm1067, %v1050, %v1084
        %v1101 = vsel %vm1068, %v1051, %v1085
        %v1102 = vsel %vm1069, %v1052, %v1086
        %v1103 = vsel %vm1070, %v1053, %v1087
        %v1104 = vsel %vm874, %v1088, 0.0
        %v1105 = vsel %vm875, %v1089, 0.0
        %v1106 = vsel %vm876, %v1090, 0.0
        %v1107 = vsel %vm877, %v1091, 0.0
        %v1108 = vsel %vm878, %v1092, 0.0
        %v1109 = vsel %vm879, %v1093, 0.0
        %v1110 = vsel %vm880, %v1094, 0.0
        %v1111 = vsel %vm881, %v1095, 0.0
        %v1112 = vsel %vm882, %v1096, 0.0
        %v1113 = vsel %vm883, %v1097, 0.0
        %v1114 = vsel %vm884, %v1098, 0.0
        %v1115 = vsel %vm885, %v1099, 0.0
        %v1116 = vsel %vm886, %v1100, 0.0
        %v1117 = vsel %vm887, %v1101, 0.0
        %v1118 = vsel %vm888, %v1102, 0.0
        %v1119 = vsel %vm889, %v1103, 0.0
        %1120 = vst [vmem:[%s9] sm:$0xff] %v1104
        %1121 = vst [vmem:[%s9 + $0x8] sm:$0xff] %v1105
        %1122 = vst [vmem:[%s9 + $0x10] sm:$0xff] %v1106
        %1123 = vst [vmem:[%s9 + $0x18] sm:$0xff] %v1107
        %1124 = vst [vmem:[%s9 + $0x20] sm:$0xff] %v1108
        %1125 = vst [vmem:[%s9 + $0x28] sm:$0xff] %v1109
        %1126 = vst [vmem:[%s9 + $0x30] sm:$0xff] %v1110
        %1127 = vst [vmem:[%s9 + $0x38] sm:$0xff] %v1111
        %1128 = vst [vmem:[%s9 + $0x40] sm:$0xff] %v1112
        %1129 = vst [vmem:[%s9 + $0x48] sm:$0xff] %v1113
        %1130 = vst [vmem:[%s9 + $0x50] sm:$0xff] %v1114
        %1131 = vst [vmem:[%s9 + $0x58] sm:$0xff] %v1115
        %1132 = vst [vmem:[%s9 + $0x60] sm:$0xff] %v1116
        %1133 = vst [vmem:[%s9 + $0x68] sm:$0xff] %v1117
        %1134 = vst [vmem:[%s9 + $0x70] sm:$0xff] %v1118
        %1135 = vst [vmem:[%s9 + $0x78] sm:$0xff] %v1119
        %v1136 = vld [vmem:[#allocation8] sm:$0x1]
        %v1137 = vadd.f32 %v1104, %v1105
        %v1138 = vadd.f32 %v1137, %v1106
        %v1139 = vadd.f32 %v1138, %v1107
        %v1140 = vadd.f32 %v1139, %v1108
        %v1141 = vadd.f32 %v1140, %v1109
        %v1142 = vadd.f32 %v1141, %v1110
        %v1143 = vadd.f32 %v1142, %v1111
        %v1144 = vadd.f32 %v1143, %v1112
        %v1145 = vadd.f32 %v1144, %v1113
        %v1146 = vadd.f32 %v1145, %v1114
        %v1147 = vadd.f32 %v1146, %v1115
        %v1148 = vadd.f32 %v1147, %v1116
        %v1149 = vadd.f32 %v1148, %v1117
        %v1150 = vadd.f32 %v1149, %v1118
        %v1151 = vadd.f32 %v1150, %v1119
        %v1152 = vrot.slane %v1151, 4
        %v1153 = vadd.f32 %v1151, %v1152
        %v1154 = vrot.slane %v1153, 2
        %v1155 = vadd.f32 %v1153, %v1154
        %v1156 = vrot.slane %v1155, 1
        %v1157 = vadd.f32 %v1155, %v1156
        %v1158 = vadd.f32 %v1136, %v1157
        %1159 = vst [vmem:[#allocation8] sm:$0x1] %v1158
        // Predicated region
        $region69: #{encoder2_forward.1} parent=55 // pred_check
          %p1160 = pneg %p248
        $region70: #{encoder2_forward.1} parent=55 // pred_check_branch
          %1162 = sbr.rel (%p1160) target = $region72
        $region71: #{encoder2_forward.1} parent=55 // pred_region
          _
        $region72: #{encoder2_forward.1} parent=55 // pred_fallthru
          _
        // Predicated region
        $region73: #{encoder2_forward.1} parent=55 // pred_check
          %p1163 = pneg %p269
        $region74: #{encoder2_forward.1} parent=55 // pred_check_branch
          %1165 = sbr.rel (%p1163) target = $region76
        $region75: #{encoder2_forward.1} parent=55 // pred_region
          %s1167 = ssub.s32 16, 16
          %1168 = vsyncadd [#allocation4], %s1167
          %s1170 = sshll.u32 [#allocation8], 4
          %s1171 = int_to_ptr.vmem [resolvable:$true] %s1170
          %1173 = dma.vmem_to_hbm [thread:$0]  %s1171, 16, %s10, [#allocation4]
        $region76: #{encoder2_forward.1} parent=55 // pred_fallthru
          _
        // Predicated region
        $region77: #{encoder2_forward.1} parent=55 // pred_check
          %p1174 = pneg %p248
        $region78: #{encoder2_forward.1} parent=55 // pred_check_branch
          %1176 = sbr.rel (%p1174) target = $region80
        $region79: #{encoder2_forward.1} parent=55 // pred_region
          _
        $region80: #{encoder2_forward.1} parent=55 // pred_fallthru
          _
        // Predicated region
        $region81: #{encoder2_forward.1} parent=55 // pred_check
          %p1177 = pneg %p269
        $region82: #{encoder2_forward.1} parent=55 // pred_check_branch
          %1179 = sbr.rel (%p1177) target = $region84
        $region83: #{encoder2_forward.1} parent=55 // pred_region
          %1180 = dma.done [#allocation4], 16
        $region84: #{encoder2_forward.1} parent=55 // pred_fallthru
          _
      $region56: #{encoder2_forward.1} parent=5 // pred_fallthru
        _
      %p1181 = scmp.le.s32.totalorder 2, %s21
      // Predicated region
      $region85: #{encoder2_forward.1} parent=5 // pred_check
        %p1182 = pneg %p1181
      $region86: #{encoder2_forward.1} parent=5 // pred_check_branch
        %1184 = sbr.rel (%p1182) target = $region88
      $region87: #{encoder2_forward.1} parent=5 // pred_region
        %s1185 = ssub.s32 %s21, 2
      $region88: #{encoder2_forward.1} parent=5 // pred_fallthru
        _
    $region6: #{encoder2_forward.1} parent=1 // loop_footer
      %s25 = sadd.s32 1, %s21
    $region7: #{encoder2_forward.1} parent=1 // loop_footer_branch
      %20 = sbr.rel target = $region3
    $region8: #{encoder2_forward.1} parent=1 // loop_exit
      _
    %1186 = vsyncpa [#allocation4], 1
    %s1187 = scalar_lea.sflag [#allocation4], 1
    %1188 = vsyncpa %s1187, 1
    %1189 = vsyncpa [#allocation5], 1
    %s1190 = scalar_lea.sflag [#allocation5], 1
    %1191 = vsyncpa %s1190, 1
    %1192 = vsyncpa [#allocation7], 1

</llo_original>
